<compile_context>
chip_gen: v5e
topology: v5e:2x2
jax: 0.10.0
libtpu: 0.0.40
codegen_flags: <defaults>
</compile_context>

<pallas_src>
import functools

import jax
import jax.numpy as jnp
from jax import lax
from jax.experimental import pallas as pl
from jax.experimental.pallas import tpu as pltpu


def _focal_loss_kernel(preds_ref, labels_ref, out_ref, acc_ref, *, gamma,
                       size_average, n_true, alpha_vals, blocks_per_chunk,
                       num_full_blocks):
    ci = pl.program_id(0)          # chunk (parallel axis, megacore on v7x)
    ki = pl.program_id(1)          # block within chunk (reduction axis)

    @pl.when(ki == 0)
    def _():
        acc_ref[...] = jnp.zeros_like(acc_ref)

    labels = labels_ref[...]                                   # (rows, 128) i32
    rows, lanes = labels.shape
    num_classes = preds_ref.shape[0]

    # Dense per-class tiles: class reduction is plain VPU maximum/add.
    cls = [preds_ref[cc].astype(jnp.float32) for cc in range(num_classes)]
    m = cls[0]
    for cc in range(1, num_classes):
        m = jnp.maximum(m, cls[cc])

    # One pass over classes: softmax denominator + one-hot selects
    # (shifted logit, its exp, alpha) -- alpha values are compile-time consts.
    sum_exp = jnp.zeros_like(m)
    sel_shift = jnp.zeros_like(m)
    sel_exp = jnp.zeros_like(m)
    a = jnp.zeros_like(m)
    for cc in range(num_classes):
        sh = cls[cc] - m
        e = jnp.exp(sh)
        sum_exp = sum_exp + e
        is_c = labels == cc
        sel_shift = jnp.where(is_c, sh, sel_shift)
        sel_exp = jnp.where(is_c, e, sel_exp)
        a = jnp.where(is_c, jnp.float32(alpha_vals[cc]), a)

    logpt = sel_shift - jnp.log(sum_exp)          # log_softmax at label class
    pt = sel_exp / sum_exp                        # softmax at label (no 2nd exp)

    one_m_pt = 1.0 - pt
    if isinstance(gamma, int):
        focal = lax.integer_pow(one_m_pt, gamma)  # VPU, no pow chain
    else:
        focal = one_m_pt ** jnp.float32(gamma)

    loss = -(a * focal) * logpt                   # (rows, 128)

    g = ci * blocks_per_chunk + ki                # global (virtual) block index

    # Interior blocks: unmasked accumulate (pure VPU adds, no iota/compare).
    @pl.when(g < num_full_blocks)
    def _():
        acc_ref[...] += loss

    # Ragged / virtual blocks: mask garbage lanes with where (NaN-safe).
    @pl.when(g >= num_full_blocks)
    def _():
        row = lax.broadcasted_iota(jnp.int32, loss.shape, 0)
        lane = lax.broadcasted_iota(jnp.int32, loss.shape, 1)
        col = (g * rows + row) * lanes + lane
        acc_ref[...] += jnp.where(col < n_true, loss, 0.0)

    @pl.when(ki == pl.num_programs(1) - 1)
    def _():
        total = jnp.sum(acc_ref[...])             # single cross-lane reduce
        if size_average:
            total = total * jnp.float32(1.0 / n_true)
        out_ref[...] = jnp.full(out_ref.shape, total, out_ref.dtype)


def make_alpha_vals(alpha, num_classes):
    """Mirrors the PyTorch __init__ alpha construction as Python floats."""
    if isinstance(alpha, (list, tuple)):
        assert len(alpha) == num_classes
        return tuple(float(a) for a in alpha)
    assert alpha < 1
    return tuple([float(1.0 - alpha)] * (num_classes - 1) + [float(alpha)])


def focal_loss(preds, labels, *, alpha=0.25, gamma=2, num_classes=3,
               reduce=True, size_average=True, block_n=131072, num_chunks=2):
    """preds: (..., num_classes) float; labels: (...) int. Returns scalar loss."""
    assert reduce, "only the reduce=True path (scalar output) is implemented"
    # TODO(synk): reduce=False returns the unreduced per-element loss in
    # PyTorch; only the reduced (scalar) path is implemented here.
    c = preds.shape[-1]
    assert c == num_classes
    assert block_n % 1024 == 0, "block_n must be a multiple of 1024"
    # NOTE: labels outside [0, num_classes) silently contribute zero loss here
    # (one-hot all zeros) instead of erroring like torch.gather.

    preds2d = preds.reshape(-1, c)                # keep native dtype (bf16 ok)
    labels1d = labels.reshape(-1).astype(jnp.int32)
    n = preds2d.shape[0]

    # Class-major relayout + pad N to a multiple of 128 (one fused copy pass).
    # TODO(synk): producer-side class-major logits would remove this pass.
    n128 = ((n + 127) // 128) * 128
    preds_cm = preds2d.T                          # (C, N)
    labels_row = labels1d.reshape(1, -1)          # (1, N)
    if n128 != n:
        preds_cm = jnp.pad(preds_cm, ((0, 0), (0, n128 - n)))
        labels_row = jnp.pad(labels_row, ((0, 0), (0, n128 - n)))
    rows_total = n128 // 128
    preds3 = preds_cm.reshape(c, rows_total, 128)     # no-copy reshape
    labels2 = labels_row.reshape(rows_total, 128)

    block_rows = block_n // 128
    if rows_total <= block_rows:
        block_rows = rows_total                   # single block = full array dim
    total_blocks = -(-rows_total // block_rows)   # ceil
    num_full_blocks = n // (block_rows * 128)     # blocks entirely inside n

    # Chunk axis for v7x dual-TensorCore; skip when too few blocks to amortize.
    nch = num_chunks if total_blocks >= 2 * num_chunks else 1
    nch = max(1, min(nch, total_blocks))
    kpc = -(-total_blocks // nch)                 # blocks per chunk (ceil)
    last_block = total_blocks - 1

    def blk(ci, ki):                              # clamp virtual blocks in-range
        return jnp.minimum(ci * kpc + ki, last_block)

    alpha_vals = make_alpha_vals(alpha, num_classes)
    kernel = functools.partial(
        _focal_loss_kernel, gamma=gamma, size_average=size_average, n_true=n,
        alpha_vals=alpha_vals, blocks_per_chunk=kpc,
        num_full_blocks=num_full_blocks)

    out = pl.pallas_call(
        kernel,
        out_shape=jax.ShapeDtypeStruct((nch * 8, 128), jnp.float32),
        grid_spec=pltpu.PrefetchScalarGridSpec(
            num_scalar_prefetch=0,
            grid=(nch, kpc),
            in_specs=[
                pl.BlockSpec((c, block_rows, 128),
                             lambda ci, ki: (0, blk(ci, ki), 0)),
                pl.BlockSpec((block_rows, 128),
                             lambda ci, ki: (blk(ci, ki), 0)),
            ],
            out_specs=pl.BlockSpec((8, 128), lambda ci, ki: (ci, 0)),
            scratch_shapes=[pltpu.VMEM((block_rows, 128), jnp.float32)],
        ),
        compiler_params=pltpu.CompilerParams(
            dimension_semantics=("parallel", "arbitrary")),
    )(preds3, labels2)

    chunk_totals = out.reshape(nch, 8, 128)[:, 0, 0]
    return jnp.sum(chunk_totals)


def focal_loss_ref(preds, labels, *, alpha=0.25, gamma=2, num_classes=3,
                   size_average=True):
    """Pure-JAX reference of the PyTorch forward (for verification)."""
    c = preds.shape[-1]
    p = preds.reshape(-1, c).astype(jnp.float32)
    lbl = labels.reshape(-1).astype(jnp.int32)
    alpha_vec = jnp.asarray(make_alpha_vals(alpha, num_classes),
                            dtype=jnp.float32)
    log_soft = jax.nn.log_softmax(p, axis=1)
    logpt = jnp.take_along_axis(log_soft, lbl[:, None], axis=1)[:, 0]
    pt = jnp.exp(logpt)
    a = alpha_vec[lbl]
    loss = a * ((1.0 - pt) ** gamma) * (-logpt)
    return jnp.mean(loss) if size_average else jnp.sum(loss)


if __name__ == "__main__":
    key = jax.random.PRNGKey(0)
    k1, k2, k3, k4, k5, k6 = jax.random.split(key, 6)

    # Case 1: small shape, single block, single chunk.
    batch, seq, num_classes = 2, 8, 3
    preds = jax.random.normal(k1, (batch, seq, num_classes), dtype=jnp.float32)
    labels = jax.random.randint(k2, (batch, seq), 0, num_classes,
                                dtype=jnp.int32)
    out = jax.block_until_ready(
        focal_loss(preds, labels, alpha=0.25, gamma=2,
                   num_classes=num_classes))
    ref = focal_loss_ref(preds, labels, alpha=0.25, gamma=2,
                         num_classes=num_classes)
    assert jnp.allclose(out, ref, rtol=1e-4, atol=1e-5), (out, ref)

    # Case 2: non-128-aligned N, list-valued alpha, sum reduction.
    n2 = 900
    preds2 = jax.random.normal(k3, (n2, num_classes), dtype=jnp.float32)
    labels2 = jax.random.randint(k4, (n2,), 0, num_classes, dtype=jnp.int32)
    alpha_list = [0.5, 0.3, 0.2]
    out2 = jax.block_until_ready(
        focal_loss(preds2, labels2, alpha=alpha_list, gamma=2,
                   num_classes=num_classes, size_average=False, block_n=2048))
    ref2 = focal_loss_ref(preds2, labels2, alpha=alpha_list, gamma=2,
                          num_classes=num_classes, size_average=False)
    assert jnp.allclose(out2, ref2, rtol=1e-4, atol=1e-4), (out2, ref2)

    # Case 3: multi-block, multi-chunk grid with ragged last block (exercises
    # the clamped index_map, per-chunk accumulators/outputs and masking).
    n3 = 9000
    preds3 = jax.random.normal(k5, (n3, num_classes), dtype=jnp.float32)
    labels3 = jax.random.randint(k6, (n3,), 0, num_classes, dtype=jnp.int32)
    out3 = jax.block_until_ready(
        focal_loss(preds3, labels3, alpha=0.25, gamma=2,
                   num_classes=num_classes, size_average=True,
                   block_n=2048, num_chunks=2))
    ref3 = focal_loss_ref(preds3, labels3, alpha=0.25, gamma=2,
                          num_classes=num_classes, size_average=True)
    assert jnp.allclose(out3, ref3, rtol=1e-4, atol=1e-5), (out3, ref3)

    print("KERNEL_OK")
</pallas_src>

<mosaic_0001>
module attributes {stable_mosaic.version = 11 : i64} {
  func.func @_focal_loss_kernel(%arg0: i32, %arg1: i32, %arg2: memref<3x1x128xf32, #tpu.memory_space<vmem>>, %arg3: memref<1x128xi32, #tpu.memory_space<vmem>>, %arg4: memref<8x128xf32, #tpu.memory_space<vmem>>, %arg5: memref<1x128xf32, #tpu.memory_space<vmem>>) attributes {dimension_semantics = [#tpu.dimension_semantics<parallel>, #tpu.dimension_semantics<arbitrary>], iteration_bounds = array<i64: 1, 1>, scalar_prefetch = 0 : i64, scratch_operands = 1 : i64, tpu.core_type = #tpu.core_type<tc>, window_params = [{transform_indices = @transform_0, window_bounds = array<i64: 3, 1, 128>}, {transform_indices = @transform_1, window_bounds = array<i64: 1, 128>}, {transform_indices = @transform_2, window_bounds = array<i64: 8, 128>}]} {
    %c0_i32 = arith.constant 0 : i32
    %0 = arith.cmpi eq, %arg1, %c0_i32 : i32
    %1 = arith.extui %0 : i1 to i32
    %c0_i32_0 = arith.constant 0 : i32
    %2 = arith.cmpi ne, %1, %c0_i32_0 : i32
    scf.if %2 {
      %cst_25 = arith.constant 0.000000e+00 : f32
      %64 = vector.broadcast %cst_25 : f32 to vector<1x128xf32>
      %c0_26 = arith.constant 0 : index
      %c0_27 = arith.constant 0 : index
      %65 = vector.load %arg5[%c0_26, %c0_27] : memref<1x128xf32, #tpu.memory_space<vmem>>, vector<1x128xf32>
      tpu.vector_store %arg5[%c0_26, %c0_27], %64 {strides = array<i32>} : memref<1x128xf32, #tpu.memory_space<vmem>>, vector<1x128xf32>,
    } else {
    }
    %c0 = arith.constant 0 : index
    %c0_1 = arith.constant 0 : index
    %3 = vector.load %arg3[%c0, %c0_1] : memref<1x128xi32, #tpu.memory_space<vmem>>, vector<1x128xi32>
    %c0_2 = arith.constant 0 : index
    %c0_3 = arith.constant 0 : index
    %c0_4 = arith.constant 0 : index
    %4 = vector.load %arg2[%c0_2, %c0_3, %c0_4] : memref<3x1x128xf32, #tpu.memory_space<vmem>>, vector<1x1x128xf32>
    %5 = vector.shape_cast %4 : vector<1x1x128xf32> to vector<1x128xf32>
    %c1 = arith.constant 1 : index
    %c0_5 = arith.constant 0 : index
    %c0_6 = arith.constant 0 : index
    %6 = vector.load %arg2[%c1, %c0_5, %c0_6] : memref<3x1x128xf32, #tpu.memory_space<vmem>>, vector<1x1x128xf32>
    %7 = vector.shape_cast %6 : vector<1x1x128xf32> to vector<1x128xf32>
    %c2 = arith.constant 2 : index
    %c0_7 = arith.constant 0 : index
    %c0_8 = arith.constant 0 : index
    %8 = vector.load %arg2[%c2, %c0_7, %c0_8] : memref<3x1x128xf32, #tpu.memory_space<vmem>>, vector<1x1x128xf32>
    %9 = vector.shape_cast %8 : vector<1x1x128xf32> to vector<1x128xf32>
    %10 = arith.maximumf %5, %7 : vector<1x128xf32>
    %11 = arith.maximumf %10, %9 : vector<1x128xf32>
    %cst = arith.constant 0.000000e+00 : f32
    %12 = vector.broadcast %cst : f32 to vector<1x128xf32>
    %cst_9 = arith.constant 0.000000e+00 : f32
    %13 = vector.broadcast %cst_9 : f32 to vector<1x128xf32>
    %cst_10 = arith.constant 0.000000e+00 : f32
    %14 = vector.broadcast %cst_10 : f32 to vector<1x128xf32>
    %cst_11 = arith.constant 0.000000e+00 : f32
    %15 = vector.broadcast %cst_11 : f32 to vector<1x128xf32>
    %16 = arith.subf %5, %11 : vector<1x128xf32>
    %17 = math.exp %16 : vector<1x128xf32>
    %18 = arith.addf %12, %17 : vector<1x128xf32>
    %c0_i32_12 = arith.constant 0 : i32
    %19 = vector.broadcast %c0_i32_12 : i32 to vector<1x128xi32>
    %20 = arith.cmpi eq, %3, %19 : vector<1x128xi32>
    %21 = arith.select %20, %16, %13 : vector<1x128xi1>, vector<1x128xf32>
    %22 = arith.select %20, %17, %14 : vector<1x128xi1>, vector<1x128xf32>
    %cst_13 = arith.constant 7.500000e-01 : f32
    %23 = vector.broadcast %cst_13 : f32 to vector<1x128xf32>
    %24 = arith.select %20, %23, %15 : vector<1x128xi1>, vector<1x128xf32>
    %25 = arith.subf %7, %11 : vector<1x128xf32>
    %26 = math.exp %25 : vector<1x128xf32>
    %27 = arith.addf %18, %26 : vector<1x128xf32>
    %c1_i32 = arith.constant 1 : i32
    %28 = vector.broadcast %c1_i32 : i32 to vector<1x128xi32>
    %29 = arith.cmpi eq, %3, %28 : vector<1x128xi32>
    %30 = arith.select %29, %25, %21 : vector<1x128xi1>, vector<1x128xf32>
    %31 = arith.select %29, %26, %22 : vector<1x128xi1>, vector<1x128xf32>
    %cst_14 = arith.constant 7.500000e-01 : f32
    %32 = vector.broadcast %cst_14 : f32 to vector<1x128xf32>
    %33 = arith.select %29, %32, %24 : vector<1x128xi1>, vector<1x128xf32>
    %34 = arith.subf %9, %11 : vector<1x128xf32>
    %35 = math.exp %34 : vector<1x128xf32>
    %36 = arith.addf %27, %35 : vector<1x128xf32>
    %c2_i32 = arith.constant 2 : i32
    %37 = vector.broadcast %c2_i32 : i32 to vector<1x128xi32>
    %38 = arith.cmpi eq, %3, %37 : vector<1x128xi32>
    %39 = arith.select %38, %34, %30 : vector<1x128xi1>, vector<1x128xf32>
    %40 = arith.select %38, %35, %31 : vector<1x128xi1>, vector<1x128xf32>
    %cst_15 = arith.constant 2.500000e-01 : f32
    %41 = vector.broadcast %cst_15 : f32 to vector<1x128xf32>
    %42 = arith.select %38, %41, %33 : vector<1x128xi1>, vector<1x128xf32>
    %43 = math.log %36 : vector<1x128xf32>
    %44 = arith.subf %39, %43 : vector<1x128xf32>
    %45 = arith.divf %40, %36 : vector<1x128xf32>
    %cst_16 = arith.constant 1.000000e+00 : f32
    %46 = vector.broadcast %cst_16 : f32 to vector<1x128xf32>
    %47 = arith.subf %46, %45 : vector<1x128xf32>
    %48 = arith.mulf %47, %47 : vector<1x128xf32>
    %49 = arith.mulf %42, %48 : vector<1x128xf32>
    %cst_17 = arith.constant 0.000000e+00 : f32
    %50 = vector.broadcast %cst_17 : f32 to vector<1x128xf32>
    %51 = arith.subf %50, %49 : vector<1x128xf32>
    %52 = arith.mulf %51, %44 : vector<1x128xf32>
    %c1_i32_18 = arith.constant 1 : i32
    %53 = arith.muli %arg0, %c1_i32_18 : i32
    %54 = arith.addi %53, %arg1 : i32
    %c0_i32_19 = arith.constant 0 : i32
    %55 = arith.cmpi slt, %54, %c0_i32_19 : i32
    %56 = arith.extui %55 : i1 to i32
    %c0_i32_20 = arith.constant 0 : i32
    %57 = arith.cmpi ne, %56, %c0_i32_20 : i32
    scf.if %57 {
      %c0_25 = arith.constant 0 : index
      %c0_26 = arith.constant 0 : index
      %64 = vector.load %arg5[%c0_25, %c0_26] : memref<1x128xf32, #tpu.memory_space<vmem>>, vector<1x128xf32>
      %65 = arith.addf %64, %52 : vector<1x128xf32>
      %c0_27 = arith.constant 0 : index
      %c0_28 = arith.constant 0 : index
      %66 = vector.load %arg5[%c0_27, %c0_28] : memref<1x128xf32, #tpu.memory_space<vmem>>, vector<1x128xf32>
      tpu.vector_store %arg5[%c0_27, %c0_28], %65 {strides = array<i32>} : memref<1x128xf32, #tpu.memory_space<vmem>>, vector<1x128xf32>,
    } else {
    }
    %c0_i32_21 = arith.constant 0 : i32
    %58 = arith.cmpi sge, %54, %c0_i32_21 : i32
    %59 = arith.extui %58 : i1 to i32
    %c0_i32_22 = arith.constant 0 : i32
    %60 = arith.cmpi ne, %59, %c0_i32_22 : i32
    scf.if %60 {
      %64 = tpu.iota {dimensions = array<i32: 0>} : vector<1x128xi32>
      %65 = tpu.iota {dimensions = array<i32: 1>} : vector<1x128xi32>
      %c1_i32_25 = arith.constant 1 : i32
      %66 = arith.muli %54, %c1_i32_25 : i32
      %67 = vector.broadcast %66 : i32 to vector<1x128xi32>
      %68 = arith.addi %67, %64 : vector<1x128xi32>
      %c128_i32 = arith.constant 128 : i32
      %69 = vector.broadcast %c128_i32 : i32 to vector<1x128xi32>
      %70 = arith.muli %68, %69 : vector<1x128xi32>
      %71 = arith.addi %70, %65 : vector<1x128xi32>
      %c0_26 = arith.constant 0 : index
      %c0_27 = arith.constant 0 : index
      %72 = vector.load %arg5[%c0_26, %c0_27] : memref<1x128xf32, #tpu.memory_space<vmem>>, vector<1x128xf32>
      %c16_i32 = arith.constant 16 : i32
      %73 = vector.broadcast %c16_i32 : i32 to vector<1x128xi32>
      %74 = arith.cmpi slt, %71, %73 : vector<1x128xi32>
      %cst_28 = arith.constant 0.000000e+00 : f32
      %75 = vector.broadcast %cst_28 : f32 to vector<1x128xf32>
      %76 = arith.select %74, %52, %75 : vector<1x128xi1>, vector<1x128xf32>
      %77 = arith.addf %72, %76 : vector<1x128xf32>
      %c0_29 = arith.constant 0 : index
      %c0_30 = arith.constant 0 : index
      %78 = vector.load %arg5[%c0_29, %c0_30] : memref<1x128xf32, #tpu.memory_space<vmem>>, vector<1x128xf32>
      tpu.vector_store %arg5[%c0_29, %c0_30], %77 {strides = array<i32>} : memref<1x128xf32, #tpu.memory_space<vmem>>, vector<1x128xf32>,
    } else {
    }
    %c0_i32_23 = arith.constant 0 : i32
    %61 = arith.cmpi eq, %arg1, %c0_i32_23 : i32
    %62 = arith.extui %61 : i1 to i32
    %c0_i32_24 = arith.constant 0 : i32
    %63 = arith.cmpi ne, %62, %c0_i32_24 : i32
    scf.if %63 {
      %c0_25 = arith.constant 0 : index
      %c0_26 = arith.constant 0 : index
      %64 = vector.load %arg5[%c0_25, %c0_26] : memref<1x128xf32, #tpu.memory_space<vmem>>, vector<1x128xf32>
      %65 = vector.shape_cast %64 : vector<1x128xf32> to vector<1x1x128xf32>
      %cst_27 = arith.constant dense<0.000000e+00> : vector<1xf32>
      %66 = vector.multi_reduction <add>, %65, %cst_27 [1, 2] : vector<1x1x128xf32> to vector<1xf32>
      %67 = vector.shape_cast %66 : vector<1xf32> to vector<1x1x1xf32>
      %68 = vector.extract %67[0, 0, 0] : f32 from vector<1x1x1xf32>
      %cst_28 = arith.constant 6.250000e-02 : f32
      %69 = arith.mulf %68, %cst_28 : f32
      %70 = vector.broadcast %69 : f32 to vector<8x128xf32>
      %c0_29 = arith.constant 0 : index
      %c0_30 = arith.constant 0 : index
      %71 = vector.load %arg4[%c0_29, %c0_30] : memref<8x128xf32, #tpu.memory_space<vmem>>, vector<8x128xf32>
      tpu.vector_store %arg4[%c0_29, %c0_30], %70 {strides = array<i32>} : memref<8x128xf32, #tpu.memory_space<vmem>>, vector<8x128xf32>,
    } else {
    }
    return
  }
  func.func @transform_0(%arg0: i32, %arg1: i32) -> (i32, i32, i32) {
    %c1_i32 = arith.constant 1 : i32
    %0 = arith.muli %arg0, %c1_i32 : i32
    %1 = arith.addi %0, %arg1 : i32
    %c0_i32 = arith.constant 0 : i32
    %2 = arith.minsi %1, %c0_i32 : i32
    %c0_i32_0 = arith.constant 0 : i32
    %c0_i32_1 = arith.constant 0 : i32
    %c0_i32_2 = arith.constant 0 : i32
    return %c0_i32_0, %2, %c0_i32_1 : i32, i32, i32
  }
  func.func @transform_1(%arg0: i32, %arg1: i32) -> (i32, i32) {
    %c1_i32 = arith.constant 1 : i32
    %0 = arith.muli %arg0, %c1_i32 : i32
    %1 = arith.addi %0, %arg1 : i32
    %c0_i32 = arith.constant 0 : i32
    %2 = arith.minsi %1, %c0_i32 : i32
    %c0_i32_0 = arith.constant 0 : i32
    %c0_i32_1 = arith.constant 0 : i32
    return %2, %c0_i32_0 : i32, i32
  }
  func.func @transform_2(%arg0: i32, %arg1: i32) -> (i32, i32) {
    %c0_i32 = arith.constant 0 : i32
    %c0_i32_0 = arith.constant 0 : i32
    return %arg0, %c0_i32 : i32, i32
  }
}

</mosaic_0001>

<llo_original>
// kernel: tpu_custom_call.1
$region0: #{tpu_custom_call.1}
  #allocation0 [shape = 'u32[]', space=smem, size = 0x4, offset = 0x4, fixed_abs, tag = 'smem constant byte address 0x4 - core index']
  #allocation1 [shape = 'u32[72,128]{1,0:T(1,128)}', space=vmem, size = 0x9000, scoped, tag = 'internal scratch']
  #allocation2 [shape = 'f32[1,128]{1,0:T(1,128)}', space=vmem, size = 0x200, scoped, tag = 'scratch operand']
  %s0 = inlined_call_operand.hbm [shape: f32[3,1,128], index: 0, kind: input, shape index: {}]
  %s1 = inlined_call_operand.hbm [shape: s32[1,128], index: 1, kind: input, shape index: {}]
  %s2 = inlined_call_operand.hbm [shape: f32[8,128], index: 2, kind: output, shape index: {}]
  %s3 = sld [smem:[#allocation0]]
  $region42: #{tpu_custom_call.1} parent=0
    _
  %s5 = ssub.s32 1, %s3
  %s6 = scalar_select 0, %s5, %s3
  $region1: #{tpu_custom_call.1} parent=0
    #allocation3 [shape = 'u8[1536]{0}', space=vmem, size = 0x800, scoped, tag = 'input window, operand 0, single buffered']
    #allocation4 [shape = 's32[1]{0}', space=sflag, size = 0x4, scoped, tag = 'scoped memory for tpu_custom_call.1']
    #allocation5 [shape = 's32[1]{0}', space=sflag, size = 0x4, scoped, tag = 'scoped memory for tpu_custom_call.1']
    #allocation6 [shape = 'u8[512]{0}', space=vmem, size = 0x400, scoped, tag = 'input window, operand 1, single buffered']
    #allocation7 [shape = 's32[1]{0}', space=sflag, size = 0x4, scoped, tag = 'scoped memory for tpu_custom_call.1']
    #allocation8 [shape = 'u8[4096]{0}', space=vmem, size = 0x1000, scoped, tag = 'output window, operand 0, single buffered']
    %7 = vsyncpa [#allocation4], 0
    %8 = vsyncpa [#allocation7], 0
    %9 = vsyncpa [#allocation5], 0
    // Predicated region
    $region2: #{tpu_custom_call.1} parent=1 // pred_check
      _
    $region3: #{tpu_custom_call.1} parent=1 // pred_check_branch
      %11 = sbr.rel (0) target = $region5
    $region4: #{tpu_custom_call.1} parent=1 // pred_region
      %s12 = sadd.s32 0, 0
      %p13 = scmp.lt.s32.totalorder %s12, 0
      %s14 = scalar_select %p13, %s12, 0
      %16 = vsyncadd [#allocation4], 0
      %s17 = scalar_lea.hbm %s0, %s14
      %s18 = sshll.u32 %s17, 4
      %s19 = int_to_ptr.hbm [resolvable:$true] %s18
      %s20 = sshll.u32 [#allocation3], 4
      %s21 = int_to_ptr.vmem [resolvable:$true] %s20
      %26 = dma.hbm_to_vmem [thread:$0]  %s19, 48, %s21, [#allocation4], 16, 16, 1
    $region5: #{tpu_custom_call.1} parent=1 // pred_fallthru
      _
    // Predicated region
    $region6: #{tpu_custom_call.1} parent=1 // pred_check
      _
    $region7: #{tpu_custom_call.1} parent=1 // pred_check_branch
      %28 = sbr.rel (0) target = $region9
    $region8: #{tpu_custom_call.1} parent=1 // pred_region
      %s29 = sadd.s32 0, 0
      %p30 = scmp.lt.s32.totalorder %s29, 0
      %s31 = scalar_select %p30, %s29, 0
      %33 = vsyncadd [#allocation7], 0
      %s34 = scalar_lea.hbm %s1, %s31
      %s36 = sshll.u32 %s34, 4
      %s37 = int_to_ptr.hbm [resolvable:$true] %s36
      %s38 = sshll.u32 [#allocation6], 4
      %s39 = int_to_ptr.vmem [resolvable:$true] %s38
      %41 = dma.hbm_to_vmem [thread:$0]  %s37, 16, %s39, [#allocation7]
    $region9: #{tpu_custom_call.1} parent=1 // pred_fallthru
      _
    // Predicated region
    $region10: #{tpu_custom_call.1} parent=1 // pred_check
      _
    $region11: #{tpu_custom_call.1} parent=1 // pred_check_branch
      %43 = sbr.rel (0) target = $region13
    $region12: #{tpu_custom_call.1} parent=1 // pred_region
      %45 = dma.done [#allocation4], 48
    $region13: #{tpu_custom_call.1} parent=1 // pred_fallthru
      _
    // Predicated region
    $region14: #{tpu_custom_call.1} parent=1 // pred_check
      _
    $region15: #{tpu_custom_call.1} parent=1 // pred_check_branch
      %47 = sbr.rel (0) target = $region17
    $region16: #{tpu_custom_call.1} parent=1 // pred_region
      %49 = dma.done [#allocation7], 16
    $region17: #{tpu_custom_call.1} parent=1 // pred_fallthru
      _
    %s50 = sadd.s32 0, 0
    %p51 = scmp.lt.s32.totalorder %s50, 0
    %s52 = scalar_select %p51, %s50, 0
    %s53 = sadd.s32 0, 0
    %p54 = scmp.lt.s32.totalorder %s53, 0
    %s55 = scalar_select %p54, %s53, 0
    %p56 = scmp.eq.s32.totalorder 0, 0
    // Predicated region
    $region18: #{tpu_custom_call.1} parent=1 // pred_check
      %p57 = pneg %p56
    $region19: #{tpu_custom_call.1} parent=1 // pred_check_branch
      %59 = sbr.rel (%p57) target = $region21
    $region20: #{tpu_custom_call.1} parent=1 // pred_region
      %60 = vst [vmem:[#allocation2] sm:$0x1] 0.0
    $region21: #{tpu_custom_call.1} parent=1 // pred_fallthru
      _
    %v61 = vld [vmem:[#allocation6] sm:$0x1]
    %v62 = vld [vmem:[#allocation3] sm:$0x1]
    %s63 = scalar_lea.vmem [#allocation3], 1
    %v64 = vld [vmem:[%s63] sm:$0x1]
    %s65 = scalar_lea.vmem [#allocation3], 2
    %v66 = vld [vmem:[%s65] sm:$0x1]
    %v67 = vmax.f32 %v62, %v64
    %v68 = vmax.f32 %v67, %v66
    %v69 = vsub.f32 %v62, %v68
    %v70 = vmul.f32 %v69, 1.442695
    %v71 = vpow.pop %v70
    %v72 = vadd.f32 %v71, 0.0
    %vm73 = vcmp.eq.s32.totalorder %v61, 0
    %v74 = vsel %vm73, %v69, 0.0
    %v75 = vsel %vm73, %v71, 0.0
    %v76 = vsel %vm73, 0.75, 0.0
    %v77 = vsub.f32 %v64, %v68
    %v78 = vmul.f32 %v77, 1.442695
    %v79 = vpow.pop %v78
    %v80 = vadd.f32 %v72, %v79
    %vm81 = vcmp.eq.s32.totalorder %v61, 1
    %v82 = vsel %vm81, %v77, %v74
    %v83 = vsel %vm81, %v79, %v75
    %v84 = vsel %vm81, 0.75, %v76
    %v85 = vsub.f32 %v66, %v68
    %v86 = vmul.f32 %v85, 1.442695
    %v87 = vpow.pop %v86
    %v88 = vadd.f32 %v80, %v87
    %vm89 = vcmp.eq.s32.totalorder %v61, 2
    %v90 = vsel %vm89, %v85, %v82
    %v91 = vsel %vm89, %v87, %v83
    %v92 = vsel %vm89, 0.25, %v84
    %v93 = vlog2.pop %v88
    %v94 = vmul.f32 %v93, 0.6931472
    %v95 = vsub.f32 %v90, %v94
    %v96 = vrcp.pop %v88
    %v97 = vmul.f32 %v88, %v96
    %v98 = vsub.f32 1.0, %v97
    %v99 = vmul.f32 %v96, %v98
    %v100 = vadd.f32 %v96, %v99
    %vm101 = vweird.f32 %v88
    %vm102 = vweird.f32 %v96
    %vm103 = vmor %vm101, %vm102
    %v104 = vsel %vm103, %v96, %v100
    %v105 = vand.u32 2147483647, %v88
    %vm106 = vcmp.eq.f32.partialorder %v105, 8.507059e+37
    %v107 = vand.u32 %v88, 2147483648
    %v108 = vor.u32 1.1754944e-38, %v107
    %v109 = vsel %vm106, %v108, %v104
    %v110 = vmul.f32 %v91, %v109
    %v111 = vsub.f32 1.0, %v110
    %v112 = vmul.f32 %v111, %v111
    %v113 = vmul.f32 %v92, %v112
    %v114 = vsub.f32 0.0, %v113
    %v115 = vmul.f32 %v114, %v95
    %s116 = sadd.s32 0, 0
    %p117 = scmp.lt.s32.totalorder %s116, 0
    // Predicated region
    $region22: #{tpu_custom_call.1} parent=1 // pred_check
      %p118 = pneg %p117
    $region23: #{tpu_custom_call.1} parent=1 // pred_check_branch
      %120 = sbr.rel (%p118) target = $region25
    $region24: #{tpu_custom_call.1} parent=1 // pred_region
      %v121 = vld [vmem:[#allocation2] sm:$0x1]
      %v122 = vadd.f32 %v121, %v115
      %123 = vst [vmem:[#allocation2] sm:$0x1] %v122
    $region25: #{tpu_custom_call.1} parent=1 // pred_fallthru
      _
    %p124 = scmp.ge.s32.totalorder %s116, 0
    // Predicated region
    $region26: #{tpu_custom_call.1} parent=1 // pred_check
      %p125 = pneg %p124
    $region27: #{tpu_custom_call.1} parent=1 // pred_check_branch
      %127 = sbr.rel (%p125) target = $region29
    $region28: #{tpu_custom_call.1} parent=1 // pred_region
      %v128 = vlaneseq
      %v129 = vshrl.u32 %v128, 7
      %v130 = vlaneseq
      %v131 = vand.u32 %v130, 127
      %v132 = vstv %s116
      %v133 = vadd.s32 %v132, %v129
      %v134 = vmul.u32 %v133, 128
      %v135 = vadd.s32 %v134, %v131
      %v136 = vld [vmem:[#allocation2] sm:$0x1]
      %vm137 = vcmp.lt.s32.totalorder %v135, 16
      %v138 = vsel %vm137, %v115, 0.0
      %v139 = vadd.f32 %v136, %v138
      %140 = vst [vmem:[#allocation2] sm:$0x1] %v139
    $region29: #{tpu_custom_call.1} parent=1 // pred_fallthru
      _
    // Predicated region
    $region30: #{tpu_custom_call.1} parent=1 // pred_check
      %p141 = pneg %p56
    $region31: #{tpu_custom_call.1} parent=1 // pred_check_branch
      %143 = sbr.rel (%p141) target = $region33
    $region32: #{tpu_custom_call.1} parent=1 // pred_region
      %v144 = vld [vmem:[#allocation2] sm:$0x1]
      %vm145 = vcmask 1040384
      %v146 = vsel %vm145, %v144, 0.0
      %147 = vadd.xlane.f32.xlu0 %v146
      %v148 = vpop.xlane.xlu0 %147
      %v149 = vrot.slane %v148, 4
      %v150 = vadd.f32 %v148, %v149
      %v151 = vrot.slane %v150, 2
      %v152 = vadd.f32 %v150, %v151
      %v153 = vrot.slane %v152, 1
      %v154 = vadd.f32 %v152, %v153
      %s155 = vtos %v154
      %s156 = smul.f32 %s155, 0.0625
      %v157 = vstv %s156
      %158 = vst [vmem:[#allocation8] sm:$0xff] %v157
    $region33: #{tpu_custom_call.1} parent=1 // pred_fallthru
      _
    // Predicated region
    $region34: #{tpu_custom_call.1} parent=1 // pred_check
      _
    $region35: #{tpu_custom_call.1} parent=1 // pred_check_branch
      %160 = sbr.rel (0) target = $region37
    $region36: #{tpu_custom_call.1} parent=1 // pred_region
      %162 = vsyncadd [#allocation5], 0
      %s164 = sshll.u32 [#allocation8], 4
      %s165 = int_to_ptr.vmem [resolvable:$true] %s164
      %s166 = sshll.u32 %s2, 4
      %s167 = int_to_ptr.hbm [resolvable:$true] %s166
      %169 = dma.vmem_to_hbm [thread:$0]  %s165, 128, %s167, [#allocation5]
    $region37: #{tpu_custom_call.1} parent=1 // pred_fallthru
      _
    // Predicated region
    $region38: #{tpu_custom_call.1} parent=1 // pred_check
      _
    $region39: #{tpu_custom_call.1} parent=1 // pred_check_branch
      %171 = sbr.rel (0) target = $region41
    $region40: #{tpu_custom_call.1} parent=1 // pred_region
      %173 = dma.done [#allocation5], 128
    $region41: #{tpu_custom_call.1} parent=1 // pred_fallthru
      _
    %174 = vsyncpa [#allocation4], 1
    %175 = vsyncpa [#allocation7], 1
    %176 = vsyncpa [#allocation5], 1

</llo_original>
